<compile_context>
chip_gen: v7x
topology: tpu7x:2x2x1
jax: 0.10.0
libtpu: 0.0.40
codegen_flags: <defaults>
</compile_context>

<pallas_src>
import jax
import jax.numpy as jnp
from jax.experimental import pallas as pl
from jax.experimental.pallas import tpu as pltpu  # noqa: F401  (TPU backend)

_LANE = 128          # lane tile (last dim)
_SUBLANE_BF16 = 16   # sublane tile for packed bf16 MXU operands


def _round_up(x, m):
    return (x + m - 1) // m * m


def _triplet_embed_kernel(a_ref, p_ref, n_ref, w1_ref, b1_ref, w2_ref, b2_ref,
                          o_ref):
    """Fused triplet embedding.

    a/p/n_ref : (M_pad, D) bf16   — row-padded flattened inputs.
    w1        : (D, H)   bf16,  b1: (1, H)   f32
    w2        : (H, Ep)  bf16,  b2: (1, Ep)  f32   (Ep = E padded to 128)
    o_ref     : (M_pad, 3*Ep) f32 — [embed_a | embed_p | embed_n] lane-packed.
    """
    w1 = w1_ref[...]
    b1 = b1_ref[...]
    w2 = w2_ref[...]
    b2 = b2_ref[...]
    e_pad = w2.shape[1]

    def embed(x):
        # Layer 1: bf16 MXU matmul, f32 accumulate, f32 bias + relu.
        h = jnp.dot(x, w1, preferred_element_type=jnp.float32) + b1
        h = jnp.maximum(h, 0.0)
        # Layer 2: cast activations back to bf16 for the MXU, f32 accumulate.
        return (jnp.dot(h.astype(jnp.bfloat16), w2,
                        preferred_element_type=jnp.float32) + b2)

    # Direct lane-offset stores at 128-aligned windows (unmasked vst).
    o_ref[:, 0:e_pad] = embed(a_ref[...]).astype(o_ref.dtype)
    o_ref[:, e_pad:2 * e_pad] = embed(p_ref[...]).astype(o_ref.dtype)
    o_ref[:, 2 * e_pad:3 * e_pad] = embed(n_ref[...]).astype(o_ref.dtype)


def triplet_embed_pallas(a_flat, p_flat, n_flat, w1, b1, w2, b2):
    """One fused kernel launch; all operands fit comfortably in VMEM."""
    m_pad, d = a_flat.shape
    h = w1.shape[1]
    e_pad = w2.shape[1]

    flops = 2 * 3 * m_pad * (d * h + h * e_pad)
    bytes_accessed = (3 * m_pad * d * 2          # a, p, n (bf16)
                      + d * h * 2 + h * 4        # w1 (bf16), b1 (f32)
                      + h * e_pad * 2 + e_pad * 4  # w2 (bf16), b2 (f32)
                      + m_pad * 3 * e_pad * 4)   # output (f32)

    return pl.pallas_call(
        _triplet_embed_kernel,
        out_shape=jax.ShapeDtypeStruct((m_pad, 3 * e_pad), jnp.float32),
        in_specs=[
            pl.BlockSpec((m_pad, d), lambda: (0, 0)),
            pl.BlockSpec((m_pad, d), lambda: (0, 0)),
            pl.BlockSpec((m_pad, d), lambda: (0, 0)),
            pl.BlockSpec((d, h), lambda: (0, 0)),
            pl.BlockSpec((1, h), lambda: (0, 0)),
            pl.BlockSpec((h, e_pad), lambda: (0, 0)),
            pl.BlockSpec((1, e_pad), lambda: (0, 0)),
        ],
        out_specs=pl.BlockSpec((m_pad, 3 * e_pad), lambda: (0, 0)),
        cost_estimate=pl.CostEstimate(flops=flops, transcendentals=0,
                                      bytes_accessed=bytes_accessed),
    )(a_flat, p_flat, n_flat, w1, b1, w2, b2)


def prepare_params(params):
    """One-time parameter preparation (hoisted out of the forward path).

    Casts weights to bf16 once and zero-pads the embedding dim to a full
    128-lane tile, so the per-call forward does no weight-side HBM traffic
    beyond the single kernel DMA.
    """
    w1, b1, w2, b2 = params
    e = w2.shape[1]
    e_pad = _round_up(e, _LANE)
    w2p = jnp.pad(w2, ((0, 0), (0, e_pad - e)))
    b2p = jnp.pad(b2, ((0, 0), (0, e_pad - e)))
    return (w1.astype(jnp.bfloat16),
            b1.astype(jnp.float32),
            w2p.astype(jnp.bfloat16),
            b2p.astype(jnp.float32),
            e)


def triplet_net_forward(a, p, n, prepared):
    """Forward pass of TripletNet: same embedding net applied to a, p, n.

    Semantics match the PyTorch module: returns (embed(a), embed(p), embed(n)).
    """
    w1, b1, w2p, b2p, e = prepared
    batch = a.shape[0]
    m_pad = _round_up(batch, _SUBLANE_BF16)
    e_pad = w2p.shape[1]

    def prep(x):
        xf = x.reshape(x.shape[0], -1).astype(jnp.bfloat16)
        return jnp.pad(xf, ((0, m_pad - batch), (0, 0)))

    packed = triplet_embed_pallas(prep(a), prep(p), prep(n),
                                  w1, b1, w2p, b2p)  # (m_pad, 3*e_pad)

    embedded_a = packed[:batch, 0:e]
    embedded_p = packed[:batch, e_pad:e_pad + e]
    embedded_n = packed[:batch, 2 * e_pad:2 * e_pad + e]
    return embedded_a, embedded_p, embedded_n


def init_params(key, in_dim, hidden_dim, embed_dim):
    """Deterministic synthetic f32 master parameters for the embedding MLP."""
    k1, k2, k3, k4 = jax.random.split(key, 4)
    w1 = jax.random.normal(k1, (in_dim, hidden_dim), jnp.float32) * 0.02
    b1 = jax.random.normal(k2, (1, hidden_dim), jnp.float32) * 0.01
    w2 = jax.random.normal(k3, (hidden_dim, embed_dim), jnp.float32) * 0.02
    b2 = jax.random.normal(k4, (1, embed_dim), jnp.float32) * 0.01
    return w1, b1, w2, b2


if __name__ == "__main__":
    # Small shapes consistent with the module's forward (NCHW image triplets).
    # TODO(synk): the original `embeddingnet` is an arbitrary injected
    # submodule; a fixed 2-layer MLP stands in for it here.
    B, C, Himg, Wimg = 2, 4, 16, 16
    hidden_dim, embed_dim = 128, 64
    in_dim = C * Himg * Wimg

    key = jax.random.PRNGKey(0)
    ka, kp, kn, kparam = jax.random.split(key, 4)
    a = jax.random.normal(ka, (B, C, Himg, Wimg), jnp.float32)
    p = jax.random.normal(kp, (B, C, Himg, Wimg), jnp.float32)
    n = jax.random.normal(kn, (B, C, Himg, Wimg), jnp.float32)

    params = init_params(kparam, in_dim, hidden_dim, embed_dim)
    prepared = prepare_params(params)  # one-time: bf16 cast + E padding

    ea, ep, en = triplet_net_forward(a, p, n, prepared)
    jax.block_until_ready((ea, ep, en))

    # Reference check in plain f32 JAX (kernel uses bf16 operands -> loose tol).
    def ref_embed(x):
        w1, b1, w2, b2 = params
        xf = x.reshape(x.shape[0], -1)
        h = jnp.maximum(xf @ w1 + b1, 0.0)
        return h @ w2 + b2

    ra, rp, rn = ref_embed(a), ref_embed(p), ref_embed(n)
    assert ea.shape == (B, embed_dim)
    assert ep.shape == (B, embed_dim)
    assert en.shape == (B, embed_dim)
    assert jnp.allclose(ea, ra, atol=3e-2, rtol=3e-2), "anchor embedding mismatch"
    assert jnp.allclose(ep, rp, atol=3e-2, rtol=3e-2), "positive embedding mismatch"
    assert jnp.allclose(en, rn, atol=3e-2, rtol=3e-2), "negative embedding mismatch"

    print("KERNEL_OK")
</pallas_src>

<mosaic_0001>
module attributes {stable_mosaic.version = 11 : i64} {
  func.func @_triplet_embed_kernel(%arg0: memref<16x1024xbf16, #tpu.memory_space<vmem>>, %arg1: memref<16x1024xbf16, #tpu.memory_space<vmem>>, %arg2: memref<16x1024xbf16, #tpu.memory_space<vmem>>, %arg3: memref<1024x128xbf16, #tpu.memory_space<vmem>>, %arg4: memref<1x128xf32, #tpu.memory_space<vmem>>, %arg5: memref<128x128xbf16, #tpu.memory_space<vmem>>, %arg6: memref<1x128xf32, #tpu.memory_space<vmem>>, %arg7: memref<16x384xf32, #tpu.memory_space<vmem>>) attributes {dimension_semantics = [], scalar_prefetch = 0 : i64, scratch_operands = 0 : i64, tpu.core_type = #tpu.core_type<tc>} {
    %c0 = arith.constant 0 : index
    %c0_0 = arith.constant 0 : index
    %0 = vector.load %arg3[%c0, %c0_0] : memref<1024x128xbf16, #tpu.memory_space<vmem>>, vector<1024x128xbf16>
    %c0_1 = arith.constant 0 : index
    %c0_2 = arith.constant 0 : index
    %1 = vector.load %arg4[%c0_1, %c0_2] : memref<1x128xf32, #tpu.memory_space<vmem>>, vector<1x128xf32>
    %c0_3 = arith.constant 0 : index
    %c0_4 = arith.constant 0 : index
    %2 = vector.load %arg5[%c0_3, %c0_4] : memref<128x128xbf16, #tpu.memory_space<vmem>>, vector<128x128xbf16>
    %c0_5 = arith.constant 0 : index
    %c0_6 = arith.constant 0 : index
    %3 = vector.load %arg6[%c0_5, %c0_6] : memref<1x128xf32, #tpu.memory_space<vmem>>, vector<1x128xf32>
    %c0_7 = arith.constant 0 : index
    %c0_8 = arith.constant 0 : index
    %4 = vector.load %arg0[%c0_7, %c0_8] : memref<16x1024xbf16, #tpu.memory_space<vmem>>, vector<16x1024xbf16>
    %cst = arith.constant dense<0.000000e+00> : vector<16x128xf32>
    %5 = tpu.matmul %4, %0, %cst {dimension_numbers = #tpu.dot_dimension_numbers<[1], [0], [0], [1], [0, 0, 1, 1], [], []>} : vector<16x1024xbf16>, vector<1024x128xbf16>, vector<16x128xf32> -> vector<16x128xf32>
    %6 = vector.broadcast %1 : vector<1x128xf32> to vector<16x128xf32>
    %7 = arith.addf %5, %6 : vector<16x128xf32>
    %cst_9 = arith.constant 0.000000e+00 : f32
    %8 = vector.broadcast %cst_9 : f32 to vector<16x128xf32>
    %9 = arith.maximumf %7, %8 : vector<16x128xf32>
    %10 = arith.truncf %9 : vector<16x128xf32> to vector<16x128xbf16>
    %cst_10 = arith.constant dense<0.000000e+00> : vector<16x128xf32>
    %11 = tpu.matmul %10, %2, %cst_10 {dimension_numbers = #tpu.dot_dimension_numbers<[1], [0], [0], [1], [0, 0, 1, 1], [], []>} : vector<16x128xbf16>, vector<128x128xbf16>, vector<16x128xf32> -> vector<16x128xf32>
    %12 = vector.broadcast %3 : vector<1x128xf32> to vector<16x128xf32>
    %13 = arith.addf %11, %12 : vector<16x128xf32>
    %c0_11 = arith.constant 0 : index
    %c0_12 = arith.constant 0 : index
    %14 = vector.load %arg7[%c0_11, %c0_12] : memref<16x384xf32, #tpu.memory_space<vmem>>, vector<16x128xf32>
    tpu.vector_store %arg7[%c0_11, %c0_12], %13 {strides = array<i32>} : memref<16x384xf32, #tpu.memory_space<vmem>>, vector<16x128xf32>,
    %c0_13 = arith.constant 0 : index
    %c0_14 = arith.constant 0 : index
    %15 = vector.load %arg1[%c0_13, %c0_14] : memref<16x1024xbf16, #tpu.memory_space<vmem>>, vector<16x1024xbf16>
    %cst_15 = arith.constant dense<0.000000e+00> : vector<16x128xf32>
    %16 = tpu.matmul %15, %0, %cst_15 {dimension_numbers = #tpu.dot_dimension_numbers<[1], [0], [0], [1], [0, 0, 1, 1], [], []>} : vector<16x1024xbf16>, vector<1024x128xbf16>, vector<16x128xf32> -> vector<16x128xf32>
    %17 = vector.broadcast %1 : vector<1x128xf32> to vector<16x128xf32>
    %18 = arith.addf %16, %17 : vector<16x128xf32>
    %cst_16 = arith.constant 0.000000e+00 : f32
    %19 = vector.broadcast %cst_16 : f32 to vector<16x128xf32>
    %20 = arith.maximumf %18, %19 : vector<16x128xf32>
    %21 = arith.truncf %20 : vector<16x128xf32> to vector<16x128xbf16>
    %cst_17 = arith.constant dense<0.000000e+00> : vector<16x128xf32>
    %22 = tpu.matmul %21, %2, %cst_17 {dimension_numbers = #tpu.dot_dimension_numbers<[1], [0], [0], [1], [0, 0, 1, 1], [], []>} : vector<16x128xbf16>, vector<128x128xbf16>, vector<16x128xf32> -> vector<16x128xf32>
    %23 = vector.broadcast %3 : vector<1x128xf32> to vector<16x128xf32>
    %24 = arith.addf %22, %23 : vector<16x128xf32>
    %c0_18 = arith.constant 0 : index
    %c128 = arith.constant 128 : index
    %25 = vector.load %arg7[%c0_18, %c128] : memref<16x384xf32, #tpu.memory_space<vmem>>, vector<16x128xf32>
    tpu.vector_store %arg7[%c0_18, %c128], %24 {strides = array<i32>} : memref<16x384xf32, #tpu.memory_space<vmem>>, vector<16x128xf32>,
    %c0_19 = arith.constant 0 : index
    %c0_20 = arith.constant 0 : index
    %26 = vector.load %arg2[%c0_19, %c0_20] : memref<16x1024xbf16, #tpu.memory_space<vmem>>, vector<16x1024xbf16>
    %cst_21 = arith.constant dense<0.000000e+00> : vector<16x128xf32>
    %27 = tpu.matmul %26, %0, %cst_21 {dimension_numbers = #tpu.dot_dimension_numbers<[1], [0], [0], [1], [0, 0, 1, 1], [], []>} : vector<16x1024xbf16>, vector<1024x128xbf16>, vector<16x128xf32> -> vector<16x128xf32>
    %28 = vector.broadcast %1 : vector<1x128xf32> to vector<16x128xf32>
    %29 = arith.addf %27, %28 : vector<16x128xf32>
    %cst_22 = arith.constant 0.000000e+00 : f32
    %30 = vector.broadcast %cst_22 : f32 to vector<16x128xf32>
    %31 = arith.maximumf %29, %30 : vector<16x128xf32>
    %32 = arith.truncf %31 : vector<16x128xf32> to vector<16x128xbf16>
    %cst_23 = arith.constant dense<0.000000e+00> : vector<16x128xf32>
    %33 = tpu.matmul %32, %2, %cst_23 {dimension_numbers = #tpu.dot_dimension_numbers<[1], [0], [0], [1], [0, 0, 1, 1], [], []>} : vector<16x128xbf16>, vector<128x128xbf16>, vector<16x128xf32> -> vector<16x128xf32>
    %34 = vector.broadcast %3 : vector<1x128xf32> to vector<16x128xf32>
    %35 = arith.addf %33, %34 : vector<16x128xf32>
    %c0_24 = arith.constant 0 : index
    %c256 = arith.constant 256 : index
    %36 = vector.load %arg7[%c0_24, %c256] : memref<16x384xf32, #tpu.memory_space<vmem>>, vector<16x128xf32>
    tpu.vector_store %arg7[%c0_24, %c256], %35 {strides = array<i32>} : memref<16x384xf32, #tpu.memory_space<vmem>>, vector<16x128xf32>,
    return
  }
}

</mosaic_0001>

<llo_original>
// kernel: tpu_custom_call.1
$region0: #{tpu_custom_call.1}
  #allocation0 [shape = 'u32[]', space=smem, size = 0x4, offset = 0x4, fixed_abs, tag = 'smem constant byte address 0x4 - core index']
  #allocation1 [shape = 'u32[144,128]{1,0:T(1,128)}', space=vmem, size = 0x12000, scoped, tag = 'internal scratch']
  %s0 = inlined_call_operand.hbm [shape: bf16[16,1024], index: 0, kind: input, shape index: {}]
  %s1 = inlined_call_operand.hbm [shape: bf16[16,1024], index: 1, kind: input, shape index: {}]
  %s2 = inlined_call_operand.hbm [shape: bf16[16,1024], index: 2, kind: input, shape index: {}]
  %s3 = inlined_call_operand.hbm [shape: bf16[1024,128], index: 3, kind: input, shape index: {}]
  %s4 = inlined_call_operand.vmem [shape: f32[1,128], index: 4, kind: input, shape index: {}]
  %s5 = inlined_call_operand.hbm [shape: bf16[128,128], index: 5, kind: input, shape index: {}]
  %s6 = inlined_call_operand.vmem [shape: f32[1,128], index: 6, kind: input, shape index: {}]
  %s7 = inlined_call_operand.hbm [shape: f32[16,384], index: 7, kind: output, shape index: {}]
  %s8 = sld [smem:[#allocation0]]
  $region58: #{tpu_custom_call.1} parent=0
    _
  %s10 = ssub.s32 1, %s8
  %s11 = scalar_select 0, %s10, %s8
  $region1: #{tpu_custom_call.1} parent=0
    #allocation2 [shape = 'u8[32768]{0}', space=vmem, size = 0x8000, scoped, tag = 'input window, operand 0, single buffered']
    #allocation3 [shape = 's32[1]{0}', space=sflag, size = 0x4, scoped, tag = 'scoped memory for tpu_custom_call.1']
    #allocation4 [shape = 's32[1]{0}', space=sflag, size = 0x4, scoped, tag = 'scoped memory for tpu_custom_call.1']
    #allocation5 [shape = 'u8[32768]{0}', space=vmem, size = 0x8000, scoped, tag = 'input window, operand 1, single buffered']
    #allocation6 [shape = 's32[1]{0}', space=sflag, size = 0x4, scoped, tag = 'scoped memory for tpu_custom_call.1']
    #allocation7 [shape = 'u8[32768]{0}', space=vmem, size = 0x8000, scoped, tag = 'input window, operand 2, single buffered']
    #allocation8 [shape = 'u8[262144]{0}', space=vmem, size = 0x40000, scoped, tag = 'input window, operand 3, single buffered']
    #allocation9 [shape = 's32[1]{0}', space=sflag, size = 0x4, scoped, tag = 'scoped memory for tpu_custom_call.1']
    #allocation10 [shape = 'u8[32768]{0}', space=vmem, size = 0x8000, scoped, tag = 'input window, operand 5, single buffered']
    #allocation11 [shape = 'u8[24576]{0}', space=vmem, size = 0x6000, scoped, tag = 'output window, operand 0, single buffered']
    %12 = vsyncpa [#allocation3], 0
    %13 = vsyncpa [#allocation6], 0
    %14 = vsyncpa [#allocation9], 0
    %15 = vsyncpa [#allocation4], 0
    // Predicated region
    $region2: #{tpu_custom_call.1} parent=1 // pred_check
      _
    $region3: #{tpu_custom_call.1} parent=1 // pred_check_branch
      %17 = sbr.rel (0) target = $region5
    $region4: #{tpu_custom_call.1} parent=1 // pred_region
      %s19 = ssub.s32 1024, 1024
      %20 = vsyncadd [#allocation3], %s19
      %s21 = sshll.u32 [#allocation2], 4
      %s22 = int_to_ptr.vmem [resolvable:$true] %s21
      %27 = dma.hbm_to_vmem [thread:$0]  %s0, 1024, %s22, [#allocation3], 512, 512, 32
    $region5: #{tpu_custom_call.1} parent=1 // pred_fallthru
      _
    // Predicated region
    $region6: #{tpu_custom_call.1} parent=1 // pred_check
      _
    $region7: #{tpu_custom_call.1} parent=1 // pred_check_branch
      %29 = sbr.rel (0) target = $region9
    $region8: #{tpu_custom_call.1} parent=1 // pred_region
      %s31 = ssub.s32 1024, 1024
      %32 = vsyncadd [#allocation6], %s31
      %s33 = sshll.u32 [#allocation5], 4
      %s34 = int_to_ptr.vmem [resolvable:$true] %s33
      %39 = dma.hbm_to_vmem [thread:$0]  %s1, 1024, %s34, [#allocation6], 512, 512, 32
    $region9: #{tpu_custom_call.1} parent=1 // pred_fallthru
      _
    // Predicated region
    $region10: #{tpu_custom_call.1} parent=1 // pred_check
      _
    $region11: #{tpu_custom_call.1} parent=1 // pred_check_branch
      %41 = sbr.rel (0) target = $region13
    $region12: #{tpu_custom_call.1} parent=1 // pred_region
      %s43 = ssub.s32 1024, 1024
      %44 = vsyncadd [#allocation6], %s43
      %s45 = sshll.u32 [#allocation7], 4
      %s46 = int_to_ptr.vmem [resolvable:$true] %s45
      %51 = dma.hbm_to_vmem [thread:$0]  %s2, 1024, %s46, [#allocation6], 512, 512, 32
    $region13: #{tpu_custom_call.1} parent=1 // pred_fallthru
      _
    // Predicated region
    $region14: #{tpu_custom_call.1} parent=1 // pred_check
      _
    $region15: #{tpu_custom_call.1} parent=1 // pred_check_branch
      %53 = sbr.rel (0) target = $region17
    $region16: #{tpu_custom_call.1} parent=1 // pred_region
      %s55 = ssub.s32 8192, 8192
      %56 = vsyncadd [#allocation9], %s55
      %s57 = sshll.u32 [#allocation8], 4
      %s58 = int_to_ptr.vmem [resolvable:$true] %s57
      %63 = dma.hbm_to_vmem [thread:$0]  %s3, 8192, %s58, [#allocation9], 64, 64, 4
    $region17: #{tpu_custom_call.1} parent=1 // pred_fallthru
      _
    // Predicated region
    $region18: #{tpu_custom_call.1} parent=1 // pred_check
      _
    $region19: #{tpu_custom_call.1} parent=1 // pred_check_branch
      %65 = sbr.rel (0) target = $region21
    $region20: #{tpu_custom_call.1} parent=1 // pred_region
      _
    $region21: #{tpu_custom_call.1} parent=1 // pred_fallthru
      _
    // Predicated region
    $region22: #{tpu_custom_call.1} parent=1 // pred_check
      _
    $region23: #{tpu_custom_call.1} parent=1 // pred_check_branch
      %67 = sbr.rel (0) target = $region25
    $region24: #{tpu_custom_call.1} parent=1 // pred_region
      %s69 = ssub.s32 1024, 1024
      %70 = vsyncadd [#allocation9], %s69
      %s71 = sshll.u32 [#allocation10], 4
      %s72 = int_to_ptr.vmem [resolvable:$true] %s71
      %77 = dma.hbm_to_vmem [thread:$0]  %s5, 1024, %s72, [#allocation9], 64, 64, 4
    $region25: #{tpu_custom_call.1} parent=1 // pred_fallthru
      _
    // Predicated region
    $region26: #{tpu_custom_call.1} parent=1 // pred_check
      _
    $region27: #{tpu_custom_call.1} parent=1 // pred_check_branch
      %79 = sbr.rel (0) target = $region29
    $region28: #{tpu_custom_call.1} parent=1 // pred_region
      _
    $region29: #{tpu_custom_call.1} parent=1 // pred_fallthru
      _
    // Predicated region
    $region30: #{tpu_custom_call.1} parent=1 // pred_check
      _
    $region31: #{tpu_custom_call.1} parent=1 // pred_check_branch
      %81 = sbr.rel (0) target = $region33
    $region32: #{tpu_custom_call.1} parent=1 // pred_region
      %82 = dma.done [#allocation3], 1024
    $region33: #{tpu_custom_call.1} parent=1 // pred_fallthru
      _
    // Predicated region
    $region34: #{tpu_custom_call.1} parent=1 // pred_check
      _
    $region35: #{tpu_custom_call.1} parent=1 // pred_check_branch
      %84 = sbr.rel (0) target = $region37
    $region36: #{tpu_custom_call.1} parent=1 // pred_region
      %85 = dma.done [#allocation6], 1024
    $region37: #{tpu_custom_call.1} parent=1 // pred_fallthru
      _
    // Predicated region
    $region38: #{tpu_custom_call.1} parent=1 // pred_check
      _
    $region39: #{tpu_custom_call.1} parent=1 // pred_check_branch
      %87 = sbr.rel (0) target = $region41
    $region40: #{tpu_custom_call.1} parent=1 // pred_region
      %88 = dma.done [#allocation6], 1024
    $region41: #{tpu_custom_call.1} parent=1 // pred_fallthru
      _
    // Predicated region
    $region42: #{tpu_custom_call.1} parent=1 // pred_check
      _
    $region43: #{tpu_custom_call.1} parent=1 // pred_check_branch
      %90 = sbr.rel (0) target = $region45
    $region44: #{tpu_custom_call.1} parent=1 // pred_region
      %91 = dma.done [#allocation9], 8192
    $region45: #{tpu_custom_call.1} parent=1 // pred_fallthru
      _
    // Predicated region
    $region46: #{tpu_custom_call.1} parent=1 // pred_check
      _
    $region47: #{tpu_custom_call.1} parent=1 // pred_check_branch
      %93 = sbr.rel (0) target = $region49
    $region48: #{tpu_custom_call.1} parent=1 // pred_region
      %94 = dma.done [#allocation9], 1024
    $region49: #{tpu_custom_call.1} parent=1 // pred_fallthru
      _
    %v96 = vld [vmem:[#allocation8] sm:$0xf]
    %v97 = vld [vmem:[#allocation8 + $0x4] sm:$0xf]
    %v98 = vld [vmem:[#allocation8 + $0x8] sm:$0xf]
    %v99 = vld [vmem:[#allocation8 + $0xc] sm:$0xf]
    %v100 = vld [vmem:[#allocation8 + $0x10] sm:$0xf]
    %v101 = vld [vmem:[#allocation8 + $0x14] sm:$0xf]
    %v102 = vld [vmem:[#allocation8 + $0x18] sm:$0xf]
    %v103 = vld [vmem:[#allocation8 + $0x1c] sm:$0xf]
    %v104 = vld [vmem:[#allocation8 + $0x20] sm:$0xf]
    %v105 = vld [vmem:[#allocation8 + $0x24] sm:$0xf]
    %v106 = vld [vmem:[#allocation8 + $0x28] sm:$0xf]
    %v107 = vld [vmem:[#allocation8 + $0x2c] sm:$0xf]
    %v108 = vld [vmem:[#allocation8 + $0x30] sm:$0xf]
    %v109 = vld [vmem:[#allocation8 + $0x34] sm:$0xf]
    %v110 = vld [vmem:[#allocation8 + $0x38] sm:$0xf]
    %v111 = vld [vmem:[#allocation8 + $0x3c] sm:$0xf]
    %v112 = vld [vmem:[#allocation8 + $0x40] sm:$0xf]
    %v113 = vld [vmem:[#allocation8 + $0x44] sm:$0xf]
    %v114 = vld [vmem:[#allocation8 + $0x48] sm:$0xf]
    %v115 = vld [vmem:[#allocation8 + $0x4c] sm:$0xf]
    %v116 = vld [vmem:[#allocation8 + $0x50] sm:$0xf]
    %v117 = vld [vmem:[#allocation8 + $0x54] sm:$0xf]
    %v118 = vld [vmem:[#allocation8 + $0x58] sm:$0xf]
    %v119 = vld [vmem:[#allocation8 + $0x5c] sm:$0xf]
    %v120 = vld [vmem:[#allocation8 + $0x60] sm:$0xf]
    %v121 = vld [vmem:[#allocation8 + $0x64] sm:$0xf]
    %v122 = vld [vmem:[#allocation8 + $0x68] sm:$0xf]
    %v123 = vld [vmem:[#allocation8 + $0x6c] sm:$0xf]
    %v124 = vld [vmem:[#allocation8 + $0x70] sm:$0xf]
    %v125 = vld [vmem:[#allocation8 + $0x74] sm:$0xf]
    %v126 = vld [vmem:[#allocation8 + $0x78] sm:$0xf]
    %v127 = vld [vmem:[#allocation8 + $0x7c] sm:$0xf]
    %v128 = vld [vmem:[#allocation8 + $0x80] sm:$0xf]
    %v129 = vld [vmem:[#allocation8 + $0x84] sm:$0xf]
    %v130 = vld [vmem:[#allocation8 + $0x88] sm:$0xf]
    %v131 = vld [vmem:[#allocation8 + $0x8c] sm:$0xf]
    %v132 = vld [vmem:[#allocation8 + $0x90] sm:$0xf]
    %v133 = vld [vmem:[#allocation8 + $0x94] sm:$0xf]
    %v134 = vld [vmem:[#allocation8 + $0x98] sm:$0xf]
    %v135 = vld [vmem:[#allocation8 + $0x9c] sm:$0xf]
    %v136 = vld [vmem:[#allocation8 + $0xa0] sm:$0xf]
    %v137 = vld [vmem:[#allocation8 + $0xa4] sm:$0xf]
    %v138 = vld [vmem:[#allocation8 + $0xa8] sm:$0xf]
    %v139 = vld [vmem:[#allocation8 + $0xac] sm:$0xf]
    %v140 = vld [vmem:[#allocation8 + $0xb0] sm:$0xf]
    %v141 = vld [vmem:[#allocation8 + $0xb4] sm:$0xf]
    %v142 = vld [vmem:[#allocation8 + $0xb8] sm:$0xf]
    %v143 = vld [vmem:[#allocation8 + $0xbc] sm:$0xf]
    %v144 = vld [vmem:[#allocation8 + $0xc0] sm:$0xf]
    %v145 = vld [vmem:[#allocation8 + $0xc4] sm:$0xf]
    %v146 = vld [vmem:[#allocation8 + $0xc8] sm:$0xf]
    %v147 = vld [vmem:[#allocation8 + $0xcc] sm:$0xf]
    %v148 = vld [vmem:[#allocation8 + $0xd0] sm:$0xf]
    %v149 = vld [vmem:[#allocation8 + $0xd4] sm:$0xf]
    %v150 = vld [vmem:[#allocation8 + $0xd8] sm:$0xf]
    %v151 = vld [vmem:[#allocation8 + $0xdc] sm:$0xf]
    %v152 = vld [vmem:[#allocation8 + $0xe0] sm:$0xf]
    %v153 = vld [vmem:[#allocation8 + $0xe4] sm:$0xf]
    %v154 = vld [vmem:[#allocation8 + $0xe8] sm:$0xf]
    %v155 = vld [vmem:[#allocation8 + $0xec] sm:$0xf]
    %v156 = vld [vmem:[#allocation8 + $0xf0] sm:$0xf]
    %v157 = vld [vmem:[#allocation8 + $0xf4] sm:$0xf]
    %v158 = vld [vmem:[#allocation8 + $0xf8] sm:$0xf]
    %v159 = vld [vmem:[#allocation8 + $0xfc] sm:$0xf]
    %v160 = vld [vmem:[#allocation8 + $0x100] sm:$0xf]
    %v161 = vld [vmem:[#allocation8 + $0x104] sm:$0xf]
    %v162 = vld [vmem:[#allocation8 + $0x108] sm:$0xf]
    %v163 = vld [vmem:[#allocation8 + $0x10c] sm:$0xf]
    %v164 = vld [vmem:[#allocation8 + $0x110] sm:$0xf]
    %v165 = vld [vmem:[#allocation8 + $0x114] sm:$0xf]
    %v166 = vld [vmem:[#allocation8 + $0x118] sm:$0xf]
    %v167 = vld [vmem:[#allocation8 + $0x11c] sm:$0xf]
    %v168 = vld [vmem:[#allocation8 + $0x120] sm:$0xf]
    %v169 = vld [vmem:[#allocation8 + $0x124] sm:$0xf]
    %v170 = vld [vmem:[#allocation8 + $0x128] sm:$0xf]
    %v171 = vld [vmem:[#allocation8 + $0x12c] sm:$0xf]
    %v172 = vld [vmem:[#allocation8 + $0x130] sm:$0xf]
    %v173 = vld [vmem:[#allocation8 + $0x134] sm:$0xf]
    %v174 = vld [vmem:[#allocation8 + $0x138] sm:$0xf]
    %v175 = vld [vmem:[#allocation8 + $0x13c] sm:$0xf]
    %v176 = vld [vmem:[#allocation8 + $0x140] sm:$0xf]
    %v177 = vld [vmem:[#allocation8 + $0x144] sm:$0xf]
    %v178 = vld [vmem:[#allocation8 + $0x148] sm:$0xf]
    %v179 = vld [vmem:[#allocation8 + $0x14c] sm:$0xf]
    %v180 = vld [vmem:[#allocation8 + $0x150] sm:$0xf]
    %v181 = vld [vmem:[#allocation8 + $0x154] sm:$0xf]
    %v182 = vld [vmem:[#allocation8 + $0x158] sm:$0xf]
    %v183 = vld [vmem:[#allocation8 + $0x15c] sm:$0xf]
    %v184 = vld [vmem:[#allocation8 + $0x160] sm:$0xf]
    %v185 = vld [vmem:[#allocation8 + $0x164] sm:$0xf]
    %v186 = vld [vmem:[#allocation8 + $0x168] sm:$0xf]
    %v187 = vld [vmem:[#allocation8 + $0x16c] sm:$0xf]
    %v188 = vld [vmem:[#allocation8 + $0x170] sm:$0xf]
    %v189 = vld [vmem:[#allocation8 + $0x174] sm:$0xf]
    %v190 = vld [vmem:[#allocation8 + $0x178] sm:$0xf]
    %v191 = vld [vmem:[#allocation8 + $0x17c] sm:$0xf]
    %v192 = vld [vmem:[#allocation8 + $0x180] sm:$0xf]
    %v193 = vld [vmem:[#allocation8 + $0x184] sm:$0xf]
    %v194 = vld [vmem:[#allocation8 + $0x188] sm:$0xf]
    %v195 = vld [vmem:[#allocation8 + $0x18c] sm:$0xf]
    %v196 = vld [vmem:[#allocation8 + $0x190] sm:$0xf]
    %v197 = vld [vmem:[#allocation8 + $0x194] sm:$0xf]
    %v198 = vld [vmem:[#allocation8 + $0x198] sm:$0xf]
    %v199 = vld [vmem:[#allocation8 + $0x19c] sm:$0xf]
    %v200 = vld [vmem:[#allocation8 + $0x1a0] sm:$0xf]
    %v201 = vld [vmem:[#allocation8 + $0x1a4] sm:$0xf]
    %v202 = vld [vmem:[#allocation8 + $0x1a8] sm:$0xf]
    %v203 = vld [vmem:[#allocation8 + $0x1ac] sm:$0xf]
    %v204 = vld [vmem:[#allocation8 + $0x1b0] sm:$0xf]
    %v205 = vld [vmem:[#allocation8 + $0x1b4] sm:$0xf]
    %v206 = vld [vmem:[#allocation8 + $0x1b8] sm:$0xf]
    %v207 = vld [vmem:[#allocation8 + $0x1bc] sm:$0xf]
    %v208 = vld [vmem:[#allocation8 + $0x1c0] sm:$0xf]
    %v209 = vld [vmem:[#allocation8 + $0x1c4] sm:$0xf]
    %v210 = vld [vmem:[#allocation8 + $0x1c8] sm:$0xf]
    %v211 = vld [vmem:[#allocation8 + $0x1cc] sm:$0xf]
    %v212 = vld [vmem:[#allocation8 + $0x1d0] sm:$0xf]
    %v213 = vld [vmem:[#allocation8 + $0x1d4] sm:$0xf]
    %v214 = vld [vmem:[#allocation8 + $0x1d8] sm:$0xf]
    %v215 = vld [vmem:[#allocation8 + $0x1dc] sm:$0xf]
    %v216 = vld [vmem:[#allocation8 + $0x1e0] sm:$0xf]
    %v217 = vld [vmem:[#allocation8 + $0x1e4] sm:$0xf]
    %v218 = vld [vmem:[#allocation8 + $0x1e8] sm:$0xf]
    %v219 = vld [vmem:[#allocation8 + $0x1ec] sm:$0xf]
    %v220 = vld [vmem:[#allocation8 + $0x1f0] sm:$0xf]
    %v221 = vld [vmem:[#allocation8 + $0x1f4] sm:$0xf]
    %v222 = vld [vmem:[#allocation8 + $0x1f8] sm:$0xf]
    %v223 = vld [vmem:[#allocation8 + $0x1fc] sm:$0xf]
    %v224 = vld [vmem:[%s4] sm:$0x1]
    %v225 = vld [vmem:[#allocation10] sm:$0xf]
    %v226 = vld [vmem:[#allocation10 + $0x4] sm:$0xf]
    %v227 = vld [vmem:[#allocation10 + $0x8] sm:$0xf]
    %v228 = vld [vmem:[#allocation10 + $0xc] sm:$0xf]
    %v229 = vld [vmem:[#allocation10 + $0x10] sm:$0xf]
    %v230 = vld [vmem:[#allocation10 + $0x14] sm:$0xf]
    %v231 = vld [vmem:[#allocation10 + $0x18] sm:$0xf]
    %v232 = vld [vmem:[#allocation10 + $0x1c] sm:$0xf]
    %v233 = vld [vmem:[#allocation10 + $0x20] sm:$0xf]
    %v234 = vld [vmem:[#allocation10 + $0x24] sm:$0xf]
    %v235 = vld [vmem:[#allocation10 + $0x28] sm:$0xf]
    %v236 = vld [vmem:[#allocation10 + $0x2c] sm:$0xf]
    %v237 = vld [vmem:[#allocation10 + $0x30] sm:$0xf]
    %v238 = vld [vmem:[#allocation10 + $0x34] sm:$0xf]
    %v239 = vld [vmem:[#allocation10 + $0x38] sm:$0xf]
    %v240 = vld [vmem:[#allocation10 + $0x3c] sm:$0xf]
    %v241 = vld [vmem:[%s6] sm:$0x1]
    %v242 = vld [vmem:[#allocation2] sm:$0xff]
    %v243 = vld [vmem:[#allocation2 + $0x8] sm:$0xff]
    %v244 = vld [vmem:[#allocation2 + $0x10] sm:$0xff]
    %v245 = vld [vmem:[#allocation2 + $0x18] sm:$0xff]
    %v246 = vld [vmem:[#allocation2 + $0x20] sm:$0xff]
    %v247 = vld [vmem:[#allocation2 + $0x28] sm:$0xff]
    %v248 = vld [vmem:[#allocation2 + $0x30] sm:$0xff]
    %v249 = vld [vmem:[#allocation2 + $0x38] sm:$0xff]
    %v251 = vlaneseq
    %v252 = vshrl.u32 %v251, 7
    %v253 = vsub.s32 0, %v252
    %v254 = vrot.slane %v224, %v253
    %v264 = vunpack.c.l.b16 %v242
    %v265 = vunpack.c.h.b16 %v242
    %v266 = vunpack.c.l.b16 %v243
    %v267 = vunpack.c.h.b16 %v243
    %v268 = vunpack.c.l.b16 %v244
    %v269 = vunpack.c.h.b16 %v244
    %v270 = vunpack.c.l.b16 %v245
    %v271 = vunpack.c.h.b16 %v245
    %v272 = vunpack.c.l.b16 %v246
    %v273 = vunpack.c.h.b16 %v246
    %v274 = vunpack.c.l.b16 %v247
    %v275 = vunpack.c.h.b16 %v247
    %v276 = vunpack.c.l.b16 %v248
    %v277 = vunpack.c.h.b16 %v248
    %v278 = vunpack.c.l.b16 %v249
    %v279 = vunpack.c.h.b16 %v249
    %v280 = vpack.c.b16 %v272, %v264
    %v281 = vpack.c.b16 %v273, %v265
    %v282 = vpack.c.b16 %v274, %v266
    %v283 = vpack.c.b16 %v275, %v267
    %v284 = vpack.c.b16 %v276, %v268
    %v285 = vpack.c.b16 %v277, %v269
    %v286 = vpack.c.b16 %v278, %v270
    %v287 = vpack.c.b16 %v279, %v271
    %v424 = vunpack.c.l.b16 %v96
    %v425 = vunpack.c.l.b16 %v97
    %v426 = vunpack.c.l.b16 %v98
    %v427 = vunpack.c.l.b16 %v99
    %v428 = vunpack.c.l.b16 %v100
    %v429 = vunpack.c.l.b16 %v101
    %v430 = vunpack.c.l.b16 %v102
    %v431 = vunpack.c.l.b16 %v103
    %v432 = vunpack.c.l.b16 %v104
    %v433 = vunpack.c.l.b16 %v105
    %v434 = vunpack.c.l.b16 %v106
    %v435 = vunpack.c.l.b16 %v107
    %v436 = vunpack.c.l.b16 %v108
    %v437 = vunpack.c.l.b16 %v109
    %v438 = vunpack.c.l.b16 %v110
    %v439 = vunpack.c.l.b16 %v111
    %v440 = vunpack.c.l.b16 %v112
    %v441 = vunpack.c.l.b16 %v113
    %v442 = vunpack.c.l.b16 %v114
    %v443 = vunpack.c.l.b16 %v115
    %v444 = vunpack.c.l.b16 %v116
    %v445 = vunpack.c.l.b16 %v117
    %v446 = vunpack.c.l.b16 %v118
    %v447 = vunpack.c.l.b16 %v119
    %v448 = vunpack.c.l.b16 %v120
    %v449 = vunpack.c.l.b16 %v121
    %v450 = vunpack.c.l.b16 %v122
    %v451 = vunpack.c.l.b16 %v123
    %v452 = vunpack.c.l.b16 %v124
    %v453 = vunpack.c.l.b16 %v125
    %v454 = vunpack.c.l.b16 %v126
    %v455 = vunpack.c.l.b16 %v127
    %v456 = vunpack.c.l.b16 %v128
    %v457 = vunpack.c.l.b16 %v129
    %v458 = vunpack.c.l.b16 %v130
    %v459 = vunpack.c.l.b16 %v131
    %v460 = vunpack.c.l.b16 %v132
    %v461 = vunpack.c.l.b16 %v133
    %v462 = vunpack.c.l.b16 %v134
    %v463 = vunpack.c.l.b16 %v135
    %v464 = vunpack.c.l.b16 %v136
    %v465 = vunpack.c.l.b16 %v137
    %v466 = vunpack.c.l.b16 %v138
    %v467 = vunpack.c.l.b16 %v139
    %v468 = vunpack.c.l.b16 %v140
    %v469 = vunpack.c.l.b16 %v141
    %v470 = vunpack.c.l.b16 %v142
    %v471 = vunpack.c.l.b16 %v143
    %v472 = vunpack.c.l.b16 %v144
    %v473 = vunpack.c.l.b16 %v145
    %v474 = vunpack.c.l.b16 %v146
    %v475 = vunpack.c.l.b16 %v147
    %v476 = vunpack.c.l.b16 %v148
    %v477 = vunpack.c.l.b16 %v149
    %v478 = vunpack.c.l.b16 %v150
    %v479 = vunpack.c.l.b16 %v151
    %v480 = vunpack.c.l.b16 %v152
    %v481 = vunpack.c.l.b16 %v153
    %v482 = vunpack.c.l.b16 %v154
    %v483 = vunpack.c.l.b16 %v155
    %v484 = vunpack.c.l.b16 %v156
    %v485 = vunpack.c.l.b16 %v157
    %v486 = vunpack.c.l.b16 %v158
    %v487 = vunpack.c.l.b16 %v159
    %v488 = vunpack.c.l.b16 %v160
    %v489 = vunpack.c.l.b16 %v161
    %v490 = vunpack.c.l.b16 %v162
    %v491 = vunpack.c.l.b16 %v163
    %v492 = vunpack.c.l.b16 %v164
    %v493 = vunpack.c.l.b16 %v165
    %v494 = vunpack.c.l.b16 %v166
    %v495 = vunpack.c.l.b16 %v167
    %v496 = vunpack.c.l.b16 %v168
    %v497 = vunpack.c.l.b16 %v169
    %v498 = vunpack.c.l.b16 %v170
    %v499 = vunpack.c.l.b16 %v171
    %v500 = vunpack.c.l.b16 %v172
    %v501 = vunpack.c.l.b16 %v173
    %v502 = vunpack.c.l.b16 %v174
    %v503 = vunpack.c.l.b16 %v175
    %v504 = vunpack.c.l.b16 %v176
    %v505 = vunpack.c.l.b16 %v177
    %v506 = vunpack.c.l.b16 %v178
    %v507 = vunpack.c.l.b16 %v179
    %v508 = vunpack.c.l.b16 %v180
    %v509 = vunpack.c.l.b16 %v181
    %v510 = vunpack.c.l.b16 %v182
    %v511 = vunpack.c.l.b16 %v183
    %v512 = vunpack.c.l.b16 %v184
    %v513 = vunpack.c.l.b16 %v185
    %v514 = vunpack.c.l.b16 %v186
    %v515 = vunpack.c.l.b16 %v187
    %v516 = vunpack.c.l.b16 %v188
    %v517 = vunpack.c.l.b16 %v189
    %v518 = vunpack.c.l.b16 %v190
    %v519 = vunpack.c.l.b16 %v191
    %v520 = vunpack.c.l.b16 %v192
    %v521 = vunpack.c.l.b16 %v193
    %v522 = vunpack.c.l.b16 %v194
    %v523 = vunpack.c.l.b16 %v195
    %v524 = vunpack.c.l.b16 %v196
    %v525 = vunpack.c.l.b16 %v197
    %v526 = vunpack.c.l.b16 %v198
    %v527 = vunpack.c.l.b16 %v199
    %v528 = vunpack.c.l.b16 %v200
    %v529 = vunpack.c.l.b16 %v201
    %v530 = vunpack.c.l.b16 %v202
    %v531 = vunpack.c.l.b16 %v203
    %v532 = vunpack.c.l.b16 %v204
    %v533 = vunpack.c.l.b16 %v205
    %v534 = vunpack.c.l.b16 %v206
    %v535 = vunpack.c.l.b16 %v207
    %v536 = vunpack.c.l.b16 %v208
    %v537 = vunpack.c.l.b16 %v209
    %v538 = vunpack.c.l.b16 %v210
    %v539 = vunpack.c.l.b16 %v211
    %v540 = vunpack.c.l.b16 %v212
    %v541 = vunpack.c.l.b16 %v213
    %v542 = vunpack.c.l.b16 %v214
    %v543 = vunpack.c.l.b16 %v215
    %v544 = vunpack.c.l.b16 %v216
    %v545 = vunpack.c.l.b16 %v217
    %v546 = vunpack.c.l.b16 %v218
    %v547 = vunpack.c.l.b16 %v219
    %v548 = vunpack.c.l.b16 %v220
    %v549 = vunpack.c.l.b16 %v221
    %v550 = vunpack.c.l.b16 %v222
    %v551 = vunpack.c.l.b16 %v223
    %v552 = vpack.c.b16 %v425, %v424
    %v553 = vpack.c.b16 %v427, %v426
    %v554 = vpack.c.b16 %v429, %v428
    %v555 = vpack.c.b16 %v431, %v430
    %v556 = vpack.c.b16 %v433, %v432
    %v557 = vpack.c.b16 %v435, %v434
    %v558 = vpack.c.b16 %v437, %v436
    %v559 = vpack.c.b16 %v439, %v438
    %v560 = vpack.c.b16 %v441, %v440
    %v561 = vpack.c.b16 %v443, %v442
    %v562 = vpack.c.b16 %v445, %v444
    %v563 = vpack.c.b16 %v447, %v446
    %v564 = vpack.c.b16 %v449, %v448
    %v565 = vpack.c.b16 %v451, %v450
    %v566 = vpack.c.b16 %v453, %v452
    %v567 = vpack.c.b16 %v455, %v454
    %v568 = vpack.c.b16 %v457, %v456
    %v569 = vpack.c.b16 %v459, %v458
    %v570 = vpack.c.b16 %v461, %v460
    %v571 = vpack.c.b16 %v463, %v462
    %v572 = vpack.c.b16 %v465, %v464
    %v573 = vpack.c.b16 %v467, %v466
    %v574 = vpack.c.b16 %v469, %v468
    %v575 = vpack.c.b16 %v471, %v470
    %v576 = vpack.c.b16 %v473, %v472
    %v577 = vpack.c.b16 %v475, %v474
    %v578 = vpack.c.b16 %v477, %v476
    %v579 = vpack.c.b16 %v479, %v478
    %v580 = vpack.c.b16 %v481, %v480
    %v581 = vpack.c.b16 %v483, %v482
    %v582 = vpack.c.b16 %v485, %v484
    %v583 = vpack.c.b16 %v487, %v486
    %v584 = vpack.c.b16 %v489, %v488
    %v585 = vpack.c.b16 %v491, %v490
    %v586 = vpack.c.b16 %v493, %v492
    %v587 = vpack.c.b16 %v495, %v494
    %v588 = vpack.c.b16 %v497, %v496
    %v589 = vpack.c.b16 %v499, %v498
    %v590 = vpack.c.b16 %v501, %v500
    %v591 = vpack.c.b16 %v503, %v502
    %v592 = vpack.c.b16 %v505, %v504
    %v593 = vpack.c.b16 %v507, %v506
    %v594 = vpack.c.b16 %v509, %v508
    %v595 = vpack.c.b16 %v511, %v510
    %v596 = vpack.c.b16 %v513, %v512
    %v597 = vpack.c.b16 %v515, %v514
    %v598 = vpack.c.b16 %v517, %v516
    %v599 = vpack.c.b16 %v519, %v518
    %v600 = vpack.c.b16 %v521, %v520
    %v601 = vpack.c.b16 %v523, %v522
    %v602 = vpack.c.b16 %v525, %v524
    %v603 = vpack.c.b16 %v527, %v526
    %v604 = vpack.c.b16 %v529, %v528
    %v605 = vpack.c.b16 %v531, %v530
    %v606 = vpack.c.b16 %v533, %v532
    %v607 = vpack.c.b16 %v535, %v534
    %v608 = vpack.c.b16 %v537, %v536
    %v609 = vpack.c.b16 %v539, %v538
    %v610 = vpack.c.b16 %v541, %v540
    %v611 = vpack.c.b16 %v543, %v542
    %v612 = vpack.c.b16 %v545, %v544
    %v613 = vpack.c.b16 %v547, %v546
    %v614 = vpack.c.b16 %v549, %v548
    %v615 = vpack.c.b16 %v551, %v550
    %680 = vmatprep.subr.bf16.mxu0 0
    %681 = vmatpush1.bf16.msra.mxu0 %v552
    %682 = vmatprep.subr.bf16.mxu0 0
    %683 = vmatpush1.bf16.msra.mxu0 %v553
    %684 = vmatprep.subr.bf16.mxu0 0
    %685 = vmatpush1.bf16.msra.mxu0 %v554
    %686 = vmatprep.subr.bf16.mxu0 0
    %687 = vmatpush1.bf16.msra.mxu0 %v555
    %688 = vmatprep.subr.bf16.mxu0 0
    %689 = vmatpush1.bf16.msra.mxu0 %v556
    %690 = vmatprep.subr.bf16.mxu0 0
    %691 = vmatpush1.bf16.msra.mxu0 %v557
    %692 = vmatprep.subr.bf16.mxu0 0
    %693 = vmatpush1.bf16.msra.mxu0 %v558
    %694 = vmatprep.subr.bf16.mxu0 0
    %695 = vmatpush1.bf16.msra.mxu0 %v559
    %696 = vmatprep.subr.bf16.mxu0 0
    %697 = vmatpush1.bf16.msra.mxu0 %v560
    %698 = vmatprep.subr.bf16.mxu0 0
    %699 = vmatpush1.bf16.msra.mxu0 %v561
    %700 = vmatprep.subr.bf16.mxu0 0
    %701 = vmatpush1.bf16.msra.mxu0 %v562
    %702 = vmatprep.subr.bf16.mxu0 0
    %703 = vmatpush1.bf16.msra.mxu0 %v563
    %704 = vmatprep.subr.bf16.mxu0 0
    %705 = vmatpush1.bf16.msra.mxu0 %v564
    %706 = vmatprep.subr.bf16.mxu0 0
    %707 = vmatpush1.bf16.msra.mxu0 %v565
    %708 = vmatprep.subr.bf16.mxu0 0
    %709 = vmatpush1.bf16.msra.mxu0 %v566
    %710 = vmatprep.subr.bf16.mxu0 0
    %711 = vmatpush1.bf16.msra.mxu0 %v567
    %712 = vmatprep.mubr.bf16.mxu0 %v281
    %713 = vmatmul.mubr.bf16.gmra.mrb[0].mxu0 %v280
    %v714 = vpop.f32.mrb[0].mxu0
    %v715 = vadd.f32 %v254, %v714
    %v716 = vpop.f32.mrb[0].mxu0
    %v717 = vpop.f32.mrb[0].mxu0
    %v718 = vadd.f32 %v254, %v717
    %v719 = vpop.f32.mrb[0].mxu0
    %720 = vdwg.mxu0
    %721 = vmatprep.subr.bf16.mxu0 0
    %722 = vmatpush1.bf16.msra.mxu0 %v568
    %723 = vmatprep.subr.bf16.mxu0 0
    %724 = vmatpush1.bf16.msra.mxu0 %v569
    %725 = vmatprep.subr.bf16.mxu0 0
    %726 = vmatpush1.bf16.msra.mxu0 %v570
    %727 = vmatprep.subr.bf16.mxu0 0
    %728 = vmatpush1.bf16.msra.mxu0 %v571
    %729 = vmatprep.subr.bf16.mxu0 0
    %730 = vmatpush1.bf16.msra.mxu0 %v572
    %731 = vmatprep.subr.bf16.mxu0 0
    %732 = vmatpush1.bf16.msra.mxu0 %v573
    %733 = vmatprep.subr.bf16.mxu0 0
    %734 = vmatpush1.bf16.msra.mxu0 %v574
    %735 = vmatprep.subr.bf16.mxu0 0
    %736 = vmatpush1.bf16.msra.mxu0 %v575
    %737 = vmatprep.subr.bf16.mxu0 0
    %738 = vmatpush1.bf16.msra.mxu0 %v576
    %739 = vmatprep.subr.bf16.mxu0 0
    %740 = vmatpush1.bf16.msra.mxu0 %v577
    %741 = vmatprep.subr.bf16.mxu0 0
    %742 = vmatpush1.bf16.msra.mxu0 %v578
    %743 = vmatprep.subr.bf16.mxu0 0
    %744 = vmatpush1.bf16.msra.mxu0 %v579
    %745 = vmatprep.subr.bf16.mxu0 0
    %746 = vmatpush1.bf16.msra.mxu0 %v580
    %747 = vmatprep.subr.bf16.mxu0 0
    %748 = vmatpush1.bf16.msra.mxu0 %v581
    %749 = vmatprep.subr.bf16.mxu0 0
    %750 = vmatpush1.bf16.msra.mxu0 %v582
    %751 = vmatprep.subr.bf16.mxu0 0
    %752 = vmatpush1.bf16.msra.mxu0 %v583
    %753 = vmatprep.mubr.bf16.mxu0 %v283
    %754 = vmatmul.mubr.bf16.gmra.mrb[0].mxu0 %v282
    %v755 = vpop.f32.mrb[0].mxu0
    %v756 = vadd.f32 %v715, %v755
    %v757 = vpop.f32.mrb[0].mxu0
    %v758 = vpop.f32.mrb[0].mxu0
    %v759 = vadd.f32 %v718, %v758
    %v760 = vpop.f32.mrb[0].mxu0
    %761 = vdwg.mxu0
    %762 = vmatprep.subr.bf16.mxu0 0
    %763 = vmatpush1.bf16.msra.mxu0 %v584
    %764 = vmatprep.subr.bf16.mxu0 0
    %765 = vmatpush1.bf16.msra.mxu0 %v585
    %766 = vmatprep.subr.bf16.mxu0 0
    %767 = vmatpush1.bf16.msra.mxu0 %v586
    %768 = vmatprep.subr.bf16.mxu0 0
    %769 = vmatpush1.bf16.msra.mxu0 %v587
    %770 = vmatprep.subr.bf16.mxu0 0
    %771 = vmatpush1.bf16.msra.mxu0 %v588
    %772 = vmatprep.subr.bf16.mxu0 0
    %773 = vmatpush1.bf16.msra.mxu0 %v589
    %774 = vmatprep.subr.bf16.mxu0 0
    %775 = vmatpush1.bf16.msra.mxu0 %v590
    %776 = vmatprep.subr.bf16.mxu0 0
    %777 = vmatpush1.bf16.msra.mxu0 %v591
    %778 = vmatprep.subr.bf16.mxu0 0
    %779 = vmatpush1.bf16.msra.mxu0 %v592
    %780 = vmatprep.subr.bf16.mxu0 0
    %781 = vmatpush1.bf16.msra.mxu0 %v593
    %782 = vmatprep.subr.bf16.mxu0 0
    %783 = vmatpush1.bf16.msra.mxu0 %v594
    %784 = vmatprep.subr.bf16.mxu0 0
    %785 = vmatpush1.bf16.msra.mxu0 %v595
    %786 = vmatprep.subr.bf16.mxu0 0
    %787 = vmatpush1.bf16.msra.mxu0 %v596
    %788 = vmatprep.subr.bf16.mxu0 0
    %789 = vmatpush1.bf16.msra.mxu0 %v597
    %790 = vmatprep.subr.bf16.mxu0 0
    %791 = vmatpush1.bf16.msra.mxu0 %v598
    %792 = vmatprep.subr.bf16.mxu0 0
    %793 = vmatpush1.bf16.msra.mxu0 %v599
    %794 = vmatprep.mubr.bf16.mxu0 %v285
    %795 = vmatmul.mubr.bf16.gmra.mrb[0].mxu0 %v284
    %v796 = vpop.f32.mrb[0].mxu0
    %v797 = vadd.f32 %v756, %v796
    %v798 = vpop.f32.mrb[0].mxu0
    %v799 = vpop.f32.mrb[0].mxu0
    %v800 = vadd.f32 %v759, %v799
    %v801 = vpop.f32.mrb[0].mxu0
    %802 = vdwg.mxu0
    %803 = vmatprep.subr.bf16.mxu0 0
    %804 = vmatpush1.bf16.msra.mxu0 %v600
    %805 = vmatprep.subr.bf16.mxu0 0
    %806 = vmatpush1.bf16.msra.mxu0 %v601
    %807 = vmatprep.subr.bf16.mxu0 0
    %808 = vmatpush1.bf16.msra.mxu0 %v602
    %809 = vmatprep.subr.bf16.mxu0 0
    %810 = vmatpush1.bf16.msra.mxu0 %v603
    %811 = vmatprep.subr.bf16.mxu0 0
    %812 = vmatpush1.bf16.msra.mxu0 %v604
    %813 = vmatprep.subr.bf16.mxu0 0
    %814 = vmatpush1.bf16.msra.mxu0 %v605
    %815 = vmatprep.subr.bf16.mxu0 0
    %816 = vmatpush1.bf16.msra.mxu0 %v606
    %817 = vmatprep.subr.bf16.mxu0 0
    %818 = vmatpush1.bf16.msra.mxu0 %v607
    %819 = vmatprep.subr.bf16.mxu0 0
    %820 = vmatpush1.bf16.msra.mxu0 %v608
    %821 = vmatprep.subr.bf16.mxu0 0
    %822 = vmatpush1.bf16.msra.mxu0 %v609
    %823 = vmatprep.subr.bf16.mxu0 0
    %824 = vmatpush1.bf16.msra.mxu0 %v610
    %825 = vmatprep.subr.bf16.mxu0 0
    %826 = vmatpush1.bf16.msra.mxu0 %v611
    %827 = vmatprep.subr.bf16.mxu0 0
    %828 = vmatpush1.bf16.msra.mxu0 %v612
    %829 = vmatprep.subr.bf16.mxu0 0
    %830 = vmatpush1.bf16.msra.mxu0 %v613
    %831 = vmatprep.subr.bf16.mxu0 0
    %832 = vmatpush1.bf16.msra.mxu0 %v614
    %833 = vmatprep.subr.bf16.mxu0 0
    %834 = vmatpush1.bf16.msra.mxu0 %v615
    %835 = vmatprep.mubr.bf16.mxu0 %v287
    %836 = vmatmul.mubr.bf16.gmra.mrb[0].mxu0 %v286
    %v837 = vpop.f32.mrb[0].mxu0
    %v838 = vadd.f32 %v797, %v837
    %v839 = vpop.f32.mrb[0].mxu0
    %v840 = vpop.f32.mrb[0].mxu0
    %v841 = vadd.f32 %v800, %v840
    %v842 = vpop.f32.mrb[0].mxu0
    %843 = vdwg.mxu0
    %v844 = vmax.f32 %v838, 0.0
    %v845 = vmax.f32 %v841, 0.0
    %v846 = vpack.c.bf16 %v845, %v844
    %v848 = vlaneseq
    %v849 = vshrl.u32 %v848, 7
    %v850 = vsub.s32 0, %v849
    %v851 = vrot.slane %v241, %v850
    %v869 = vunpack.c.l.b16 %v225
    %v870 = vunpack.c.l.b16 %v226
    %v871 = vunpack.c.l.b16 %v227
    %v872 = vunpack.c.l.b16 %v228
    %v873 = vunpack.c.l.b16 %v229
    %v874 = vunpack.c.l.b16 %v230
    %v875 = vunpack.c.l.b16 %v231
    %v876 = vunpack.c.l.b16 %v232
    %v877 = vunpack.c.l.b16 %v233
    %v878 = vunpack.c.l.b16 %v234
    %v879 = vunpack.c.l.b16 %v235
    %v880 = vunpack.c.l.b16 %v236
    %v881 = vunpack.c.l.b16 %v237
    %v882 = vunpack.c.l.b16 %v238
    %v883 = vunpack.c.l.b16 %v239
    %v884 = vunpack.c.l.b16 %v240
    %v885 = vpack.c.b16 %v870, %v869
    %v886 = vpack.c.b16 %v872, %v871
    %v887 = vpack.c.b16 %v874, %v873
    %v888 = vpack.c.b16 %v876, %v875
    %v889 = vpack.c.b16 %v878, %v877
    %v890 = vpack.c.b16 %v880, %v879
    %v891 = vpack.c.b16 %v882, %v881
    %v892 = vpack.c.b16 %v884, %v883
    %901 = vmatprep.subr.bf16.mxu0 0
    %902 = vmatpush1.bf16.msra.mxu0 %v885
    %903 = vmatprep.subr.bf16.mxu0 0
    %904 = vmatpush1.bf16.msra.mxu0 %v886
    %905 = vmatprep.subr.bf16.mxu0 0
    %906 = vmatpush1.bf16.msra.mxu0 %v887
    %907 = vmatprep.subr.bf16.mxu0 0
    %908 = vmatpush1.bf16.msra.mxu0 %v888
    %909 = vmatprep.subr.bf16.mxu0 0
    %910 = vmatpush1.bf16.msra.mxu0 %v889
    %911 = vmatprep.subr.bf16.mxu0 0
    %912 = vmatpush1.bf16.msra.mxu0 %v890
    %913 = vmatprep.subr.bf16.mxu0 0
    %914 = vmatpush1.bf16.msra.mxu0 %v891
    %915 = vmatprep.subr.bf16.mxu0 0
    %916 = vmatpush1.bf16.msra.mxu0 %v892
    %917 = vmatprep.subr.bf16.mxu0 0
    %918 = vmatpush1.bf16.msra.mxu0 0
    %919 = vmatprep.subr.bf16.mxu0 0
    %920 = vmatpush1.bf16.msra.mxu0 0
    %921 = vmatprep.subr.bf16.mxu0 0
    %922 = vmatpush1.bf16.msra.mxu0 0
    %923 = vmatprep.subr.bf16.mxu0 0
    %924 = vmatpush1.bf16.msra.mxu0 0
    %925 = vmatprep.subr.bf16.mxu0 0
    %926 = vmatpush1.bf16.msra.mxu0 0
    %927 = vmatprep.subr.bf16.mxu0 0
    %928 = vmatpush1.bf16.msra.mxu0 0
    %929 = vmatprep.subr.bf16.mxu0 0
    %930 = vmatpush1.bf16.msra.mxu0 0
    %931 = vmatprep.subr.bf16.mxu0 0
    %932 = vmatpush1.bf16.msra.mxu0 0
    %933 = vmatprep.mubr.bf16.mxu0 0
    %934 = vmatmul.mubr.bf16.gmra.mrb[0].mxu0 %v846
    %v935 = vpop.f32.mrb[0].mxu0
    %v936 = vadd.f32 %v851, %v935
    %v937 = vpop.f32.mrb[0].mxu0
    %v938 = vpop.f32.mrb[0].mxu0
    %v939 = vadd.f32 %v851, %v938
    %v940 = vpop.f32.mrb[0].mxu0
    %941 = vdwg.mxu0
    %942 = vst [vmem:[#allocation11] sm:$0xff] %v936
    %943 = vst [vmem:[#allocation11 + $0x18] sm:$0xff] %v939
    %v944 = vld [vmem:[#allocation5] sm:$0xff]
    %v945 = vld [vmem:[#allocation5 + $0x8] sm:$0xff]
    %v946 = vld [vmem:[#allocation5 + $0x10] sm:$0xff]
    %v947 = vld [vmem:[#allocation5 + $0x18] sm:$0xff]
    %v948 = vld [vmem:[#allocation5 + $0x20] sm:$0xff]
    %v949 = vld [vmem:[#allocation5 + $0x28] sm:$0xff]
    %v950 = vld [vmem:[#allocation5 + $0x30] sm:$0xff]
    %v951 = vld [vmem:[#allocation5 + $0x38] sm:$0xff]
    %v960 = vunpack.c.l.b16 %v944
    %v961 = vunpack.c.h.b16 %v944
    %v962 = vunpack.c.l.b16 %v945
    %v963 = vunpack.c.h.b16 %v945
    %v964 = vunpack.c.l.b16 %v946
    %v965 = vunpack.c.h.b16 %v946
    %v966 = vunpack.c.l.b16 %v947
    %v967 = vunpack.c.h.b16 %v947
    %v968 = vunpack.c.l.b16 %v948
    %v969 = vunpack.c.h.b16 %v948
    %v970 = vunpack.c.l.b16 %v949
    %v971 = vunpack.c.h.b16 %v949
    %v972 = vunpack.c.l.b16 %v950
    %v973 = vunpack.c.h.b16 %v950
    %v974 = vunpack.c.l.b16 %v951
    %v975 = vunpack.c.h.b16 %v951
    %v976 = vpack.c.b16 %v968, %v960
    %v977 = vpack.c.b16 %v969, %v961
    %v978 = vpack.c.b16 %v970, %v962
    %v979 = vpack.c.b16 %v971, %v963
    %v980 = vpack.c.b16 %v972, %v964
    %v981 = vpack.c.b16 %v973, %v965
    %v982 = vpack.c.b16 %v974, %v966
    %v983 = vpack.c.b16 %v975, %v967
    %992 = vmatprep.subr.bf16.mxu0 0
    %993 = vmatpush1.bf16.msra.mxu0 %v552
    %994 = vmatprep.subr.bf16.mxu0 0
    %995 = vmatpush1.bf16.msra.mxu0 %v553
    %996 = vmatprep.subr.bf16.mxu0 0
    %997 = vmatpush1.bf16.msra.mxu0 %v554
    %998 = vmatprep.subr.bf16.mxu0 0
    %999 = vmatpush1.bf16.msra.mxu0 %v555
    %1000 = vmatprep.subr.bf16.mxu0 0
    %1001 = vmatpush1.bf16.msra.mxu0 %v556
    %1002 = vmatprep.subr.bf16.mxu0 0
    %1003 = vmatpush1.bf16.msra.mxu0 %v557
    %1004 = vmatprep.subr.bf16.mxu0 0
    %1005 = vmatpush1.bf16.msra.mxu0 %v558
    %1006 = vmatprep.subr.bf16.mxu0 0
    %1007 = vmatpush1.bf16.msra.mxu0 %v559
    %1008 = vmatprep.subr.bf16.mxu0 0
    %1009 = vmatpush1.bf16.msra.mxu0 %v560
    %1010 = vmatprep.subr.bf16.mxu0 0
    %1011 = vmatpush1.bf16.msra.mxu0 %v561
    %1012 = vmatprep.subr.bf16.mxu0 0
    %1013 = vmatpush1.bf16.msra.mxu0 %v562
    %1014 = vmatprep.subr.bf16.mxu0 0
    %1015 = vmatpush1.bf16.msra.mxu0 %v563
    %1016 = vmatprep.subr.bf16.mxu0 0
    %1017 = vmatpush1.bf16.msra.mxu0 %v564
    %1018 = vmatprep.subr.bf16.mxu0 0
    %1019 = vmatpush1.bf16.msra.mxu0 %v565
    %1020 = vmatprep.subr.bf16.mxu0 0
    %1021 = vmatpush1.bf16.msra.mxu0 %v566
    %1022 = vmatprep.subr.bf16.mxu0 0
    %1023 = vmatpush1.bf16.msra.mxu0 %v567
    %1024 = vmatprep.mubr.bf16.mxu0 %v977
    %1025 = vmatmul.mubr.bf16.gmra.mrb[0].mxu0 %v976
    %v1026 = vpop.f32.mrb[0].mxu0
    %v1027 = vadd.f32 %v254, %v1026
    %v1028 = vpop.f32.mrb[0].mxu0
    %v1029 = vpop.f32.mrb[0].mxu0
    %v1030 = vadd.f32 %v254, %v1029
    %v1031 = vpop.f32.mrb[0].mxu0
    %1032 = vdwg.mxu0
    %1033 = vmatprep.subr.bf16.mxu0 0
    %1034 = vmatpush1.bf16.msra.mxu0 %v568
    %1035 = vmatprep.subr.bf16.mxu0 0
    %1036 = vmatpush1.bf16.msra.mxu0 %v569
    %1037 = vmatprep.subr.bf16.mxu0 0
    %1038 = vmatpush1.bf16.msra.mxu0 %v570
    %1039 = vmatprep.subr.bf16.mxu0 0
    %1040 = vmatpush1.bf16.msra.mxu0 %v571
    %1041 = vmatprep.subr.bf16.mxu0 0
    %1042 = vmatpush1.bf16.msra.mxu0 %v572
    %1043 = vmatprep.subr.bf16.mxu0 0
    %1044 = vmatpush1.bf16.msra.mxu0 %v573
    %1045 = vmatprep.subr.bf16.mxu0 0
    %1046 = vmatpush1.bf16.msra.mxu0 %v574
    %1047 = vmatprep.subr.bf16.mxu0 0
    %1048 = vmatpush1.bf16.msra.mxu0 %v575
    %1049 = vmatprep.subr.bf16.mxu0 0
    %1050 = vmatpush1.bf16.msra.mxu0 %v576
    %1051 = vmatprep.subr.bf16.mxu0 0
    %1052 = vmatpush1.bf16.msra.mxu0 %v577
    %1053 = vmatprep.subr.bf16.mxu0 0
    %1054 = vmatpush1.bf16.msra.mxu0 %v578
    %1055 = vmatprep.subr.bf16.mxu0 0
    %1056 = vmatpush1.bf16.msra.mxu0 %v579
    %1057 = vmatprep.subr.bf16.mxu0 0
    %1058 = vmatpush1.bf16.msra.mxu0 %v580
    %1059 = vmatprep.subr.bf16.mxu0 0
    %1060 = vmatpush1.bf16.msra.mxu0 %v581
    %1061 = vmatprep.subr.bf16.mxu0 0
    %1062 = vmatpush1.bf16.msra.mxu0 %v582
    %1063 = vmatprep.subr.bf16.mxu0 0
    %1064 = vmatpush1.bf16.msra.mxu0 %v583
    %1065 = vmatprep.mubr.bf16.mxu0 %v979
    %1066 = vmatmul.mubr.bf16.gmra.mrb[0].mxu0 %v978
    %v1067 = vpop.f32.mrb[0].mxu0
    %v1068 = vadd.f32 %v1027, %v1067
    %v1069 = vpop.f32.mrb[0].mxu0
    %v1070 = vpop.f32.mrb[0].mxu0
    %v1071 = vadd.f32 %v1030, %v1070
    %v1072 = vpop.f32.mrb[0].mxu0
    %1073 = vdwg.mxu0
    %1074 = vmatprep.subr.bf16.mxu0 0
    %1075 = vmatpush1.bf16.msra.mxu0 %v584
    %1076 = vmatprep.subr.bf16.mxu0 0
    %1077 = vmatpush1.bf16.msra.mxu0 %v585
    %1078 = vmatprep.subr.bf16.mxu0 0
    %1079 = vmatpush1.bf16.msra.mxu0 %v586
    %1080 = vmatprep.subr.bf16.mxu0 0
    %1081 = vmatpush1.bf16.msra.mxu0 %v587
    %1082 = vmatprep.subr.bf16.mxu0 0
    %1083 = vmatpush1.bf16.msra.mxu0 %v588
    %1084 = vmatprep.subr.bf16.mxu0 0
    %1085 = vmatpush1.bf16.msra.mxu0 %v589
    %1086 = vmatprep.subr.bf16.mxu0 0
    %1087 = vmatpush1.bf16.msra.mxu0 %v590
    %1088 = vmatprep.subr.bf16.mxu0 0
    %1089 = vmatpush1.bf16.msra.mxu0 %v591
    %1090 = vmatprep.subr.bf16.mxu0 0
    %1091 = vmatpush1.bf16.msra.mxu0 %v592
    %1092 = vmatprep.subr.bf16.mxu0 0
    %1093 = vmatpush1.bf16.msra.mxu0 %v593
    %1094 = vmatprep.subr.bf16.mxu0 0
    %1095 = vmatpush1.bf16.msra.mxu0 %v594
    %1096 = vmatprep.subr.bf16.mxu0 0
    %1097 = vmatpush1.bf16.msra.mxu0 %v595
    %1098 = vmatprep.subr.bf16.mxu0 0
    %1099 = vmatpush1.bf16.msra.mxu0 %v596
    %1100 = vmatprep.subr.bf16.mxu0 0
    %1101 = vmatpush1.bf16.msra.mxu0 %v597
    %1102 = vmatprep.subr.bf16.mxu0 0
    %1103 = vmatpush1.bf16.msra.mxu0 %v598
    %1104 = vmatprep.subr.bf16.mxu0 0
    %1105 = vmatpush1.bf16.msra.mxu0 %v599
    %1106 = vmatprep.mubr.bf16.mxu0 %v981
    %1107 = vmatmul.mubr.bf16.gmra.mrb[0].mxu0 %v980
    %v1108 = vpop.f32.mrb[0].mxu0
    %v1109 = vadd.f32 %v1068, %v1108
    %v1110 = vpop.f32.mrb[0].mxu0
    %v1111 = vpop.f32.mrb[0].mxu0
    %v1112 = vadd.f32 %v1071, %v1111
    %v1113 = vpop.f32.mrb[0].mxu0
    %1114 = vdwg.mxu0
    %1115 = vmatprep.subr.bf16.mxu0 0
    %1116 = vmatpush1.bf16.msra.mxu0 %v600
    %1117 = vmatprep.subr.bf16.mxu0 0
    %1118 = vmatpush1.bf16.msra.mxu0 %v601
    %1119 = vmatprep.subr.bf16.mxu0 0
    %1120 = vmatpush1.bf16.msra.mxu0 %v602
    %1121 = vmatprep.subr.bf16.mxu0 0
    %1122 = vmatpush1.bf16.msra.mxu0 %v603
    %1123 = vmatprep.subr.bf16.mxu0 0
    %1124 = vmatpush1.bf16.msra.mxu0 %v604
    %1125 = vmatprep.subr.bf16.mxu0 0
    %1126 = vmatpush1.bf16.msra.mxu0 %v605
    %1127 = vmatprep.subr.bf16.mxu0 0
    %1128 = vmatpush1.bf16.msra.mxu0 %v606
    %1129 = vmatprep.subr.bf16.mxu0 0
    %1130 = vmatpush1.bf16.msra.mxu0 %v607
    %1131 = vmatprep.subr.bf16.mxu0 0
    %1132 = vmatpush1.bf16.msra.mxu0 %v608
    %1133 = vmatprep.subr.bf16.mxu0 0
    %1134 = vmatpush1.bf16.msra.mxu0 %v609
    %1135 = vmatprep.subr.bf16.mxu0 0
    %1136 = vmatpush1.bf16.msra.mxu0 %v610
    %1137 = vmatprep.subr.bf16.mxu0 0
    %1138 = vmatpush1.bf16.msra.mxu0 %v611
    %1139 = vmatprep.subr.bf16.mxu0 0
    %1140 = vmatpush1.bf16.msra.mxu0 %v612
    %1141 = vmatprep.subr.bf16.mxu0 0
    %1142 = vmatpush1.bf16.msra.mxu0 %v613
    %1143 = vmatprep.subr.bf16.mxu0 0
    %1144 = vmatpush1.bf16.msra.mxu0 %v614
    %1145 = vmatprep.subr.bf16.mxu0 0
    %1146 = vmatpush1.bf16.msra.mxu0 %v615
    %1147 = vmatprep.mubr.bf16.mxu0 %v983
    %1148 = vmatmul.mubr.bf16.gmra.mrb[0].mxu0 %v982
    %v1149 = vpop.f32.mrb[0].mxu0
    %v1150 = vadd.f32 %v1109, %v1149
    %v1151 = vpop.f32.mrb[0].mxu0
    %v1152 = vpop.f32.mrb[0].mxu0
    %v1153 = vadd.f32 %v1112, %v1152
    %v1154 = vpop.f32.mrb[0].mxu0
    %1155 = vdwg.mxu0
    %v1156 = vmax.f32 %v1150, 0.0
    %v1157 = vmax.f32 %v1153, 0.0
    %v1158 = vpack.c.bf16 %v1157, %v1156
    %1159 = vmatprep.subr.bf16.mxu0 0
    %1160 = vmatpush1.bf16.msra.mxu0 %v885
    %1161 = vmatprep.subr.bf16.mxu0 0
    %1162 = vmatpush1.bf16.msra.mxu0 %v886
    %1163 = vmatprep.subr.bf16.mxu0 0
    %1164 = vmatpush1.bf16.msra.mxu0 %v887
    %1165 = vmatprep.subr.bf16.mxu0 0
    %1166 = vmatpush1.bf16.msra.mxu0 %v888
    %1167 = vmatprep.subr.bf16.mxu0 0
    %1168 = vmatpush1.bf16.msra.mxu0 %v889
    %1169 = vmatprep.subr.bf16.mxu0 0
    %1170 = vmatpush1.bf16.msra.mxu0 %v890
    %1171 = vmatprep.subr.bf16.mxu0 0
    %1172 = vmatpush1.bf16.msra.mxu0 %v891
    %1173 = vmatprep.subr.bf16.mxu0 0
    %1174 = vmatpush1.bf16.msra.mxu0 %v892
    %1175 = vmatprep.subr.bf16.mxu0 0
    %1176 = vmatpush1.bf16.msra.mxu0 0
    %1177 = vmatprep.subr.bf16.mxu0 0
    %1178 = vmatpush1.bf16.msra.mxu0 0
    %1179 = vmatprep.subr.bf16.mxu0 0
    %1180 = vmatpush1.bf16.msra.mxu0 0
    %1181 = vmatprep.subr.bf16.mxu0 0
    %1182 = vmatpush1.bf16.msra.mxu0 0
    %1183 = vmatprep.subr.bf16.mxu0 0
    %1184 = vmatpush1.bf16.msra.mxu0 0
    %1185 = vmatprep.subr.bf16.mxu0 0
    %1186 = vmatpush1.bf16.msra.mxu0 0
    %1187 = vmatprep.subr.bf16.mxu0 0
    %1188 = vmatpush1.bf16.msra.mxu0 0
    %1189 = vmatprep.subr.bf16.mxu0 0
    %1190 = vmatpush1.bf16.msra.mxu0 0
    %1191 = vmatprep.mubr.bf16.mxu0 0
    %1192 = vmatmul.mubr.bf16.gmra.mrb[0].mxu0 %v1158
    %v1193 = vpop.f32.mrb[0].mxu0
    %v1194 = vadd.f32 %v851, %v1193
    %v1195 = vpop.f32.mrb[0].mxu0
    %v1196 = vpop.f32.mrb[0].mxu0
    %v1197 = vadd.f32 %v851, %v1196
    %v1198 = vpop.f32.mrb[0].mxu0
    %1199 = vdwg.mxu0
    %1200 = vst [vmem:[#allocation11 + $0x8] sm:$0xff] %v1194
    %1201 = vst [vmem:[#allocation11 + $0x20] sm:$0xff] %v1197
    %v1202 = vld [vmem:[#allocation7] sm:$0xff]
    %v1203 = vld [vmem:[#allocation7 + $0x8] sm:$0xff]
    %v1204 = vld [vmem:[#allocation7 + $0x10] sm:$0xff]
    %v1205 = vld [vmem:[#allocation7 + $0x18] sm:$0xff]
    %v1206 = vld [vmem:[#allocation7 + $0x20] sm:$0xff]
    %v1207 = vld [vmem:[#allocation7 + $0x28] sm:$0xff]
    %v1208 = vld [vmem:[#allocation7 + $0x30] sm:$0xff]
    %v1209 = vld [vmem:[#allocation7 + $0x38] sm:$0xff]
    %v1218 = vunpack.c.l.b16 %v1202
    %v1219 = vunpack.c.h.b16 %v1202
    %v1220 = vunpack.c.l.b16 %v1203
    %v1221 = vunpack.c.h.b16 %v1203
    %v1222 = vunpack.c.l.b16 %v1204
    %v1223 = vunpack.c.h.b16 %v1204
    %v1224 = vunpack.c.l.b16 %v1205
    %v1225 = vunpack.c.h.b16 %v1205
    %v1226 = vunpack.c.l.b16 %v1206
    %v1227 = vunpack.c.h.b16 %v1206
    %v1228 = vunpack.c.l.b16 %v1207
    %v1229 = vunpack.c.h.b16 %v1207
    %v1230 = vunpack.c.l.b16 %v1208
    %v1231 = vunpack.c.h.b16 %v1208
    %v1232 = vunpack.c.l.b16 %v1209
    %v1233 = vunpack.c.h.b16 %v1209
    %v1234 = vpack.c.b16 %v1226, %v1218
    %v1235 = vpack.c.b16 %v1227, %v1219
    %v1236 = vpack.c.b16 %v1228, %v1220
    %v1237 = vpack.c.b16 %v1229, %v1221
    %v1238 = vpack.c.b16 %v1230, %v1222
    %v1239 = vpack.c.b16 %v1231, %v1223
    %v1240 = vpack.c.b16 %v1232, %v1224
    %v1241 = vpack.c.b16 %v1233, %v1225
    %1250 = vmatprep.subr.bf16.mxu0 0
    %1251 = vmatpush1.bf16.msra.mxu0 %v552
    %1252 = vmatprep.subr.bf16.mxu0 0
    %1253 = vmatpush1.bf16.msra.mxu0 %v553
    %1254 = vmatprep.subr.bf16.mxu0 0
    %1255 = vmatpush1.bf16.msra.mxu0 %v554
    %1256 = vmatprep.subr.bf16.mxu0 0
    %1257 = vmatpush1.bf16.msra.mxu0 %v555
    %1258 = vmatprep.subr.bf16.mxu0 0
    %1259 = vmatpush1.bf16.msra.mxu0 %v556
    %1260 = vmatprep.subr.bf16.mxu0 0
    %1261 = vmatpush1.bf16.msra.mxu0 %v557
    %1262 = vmatprep.subr.bf16.mxu0 0
    %1263 = vmatpush1.bf16.msra.mxu0 %v558
    %1264 = vmatprep.subr.bf16.mxu0 0
    %1265 = vmatpush1.bf16.msra.mxu0 %v559
    %1266 = vmatprep.subr.bf16.mxu0 0
    %1267 = vmatpush1.bf16.msra.mxu0 %v560
    %1268 = vmatprep.subr.bf16.mxu0 0
    %1269 = vmatpush1.bf16.msra.mxu0 %v561
    %1270 = vmatprep.subr.bf16.mxu0 0
    %1271 = vmatpush1.bf16.msra.mxu0 %v562
    %1272 = vmatprep.subr.bf16.mxu0 0
    %1273 = vmatpush1.bf16.msra.mxu0 %v563
    %1274 = vmatprep.subr.bf16.mxu0 0
    %1275 = vmatpush1.bf16.msra.mxu0 %v564
    %1276 = vmatprep.subr.bf16.mxu0 0
    %1277 = vmatpush1.bf16.msra.mxu0 %v565
    %1278 = vmatprep.subr.bf16.mxu0 0
    %1279 = vmatpush1.bf16.msra.mxu0 %v566
    %1280 = vmatprep.subr.bf16.mxu0 0
    %1281 = vmatpush1.bf16.msra.mxu0 %v567
    %1282 = vmatprep.mubr.bf16.mxu0 %v1235
    %1283 = vmatmul.mubr.bf16.gmra.mrb[0].mxu0 %v1234
    %v1284 = vpop.f32.mrb[0].mxu0
    %v1285 = vadd.f32 %v254, %v1284
    %v1286 = vpop.f32.mrb[0].mxu0
    %v1287 = vpop.f32.mrb[0].mxu0
    %v1288 = vadd.f32 %v254, %v1287
    %v1289 = vpop.f32.mrb[0].mxu0
    %1290 = vdwg.mxu0
    %1291 = vmatprep.subr.bf16.mxu0 0
    %1292 = vmatpush1.bf16.msra.mxu0 %v568
    %1293 = vmatprep.subr.bf16.mxu0 0
    %1294 = vmatpush1.bf16.msra.mxu0 %v569
    %1295 = vmatprep.subr.bf16.mxu0 0
    %1296 = vmatpush1.bf16.msra.mxu0 %v570
    %1297 = vmatprep.subr.bf16.mxu0 0
    %1298 = vmatpush1.bf16.msra.mxu0 %v571
    %1299 = vmatprep.subr.bf16.mxu0 0
    %1300 = vmatpush1.bf16.msra.mxu0 %v572
    %1301 = vmatprep.subr.bf16.mxu0 0
    %1302 = vmatpush1.bf16.msra.mxu0 %v573
    %1303 = vmatprep.subr.bf16.mxu0 0
    %1304 = vmatpush1.bf16.msra.mxu0 %v574
    %1305 = vmatprep.subr.bf16.mxu0 0
    %1306 = vmatpush1.bf16.msra.mxu0 %v575
    %1307 = vmatprep.subr.bf16.mxu0 0
    %1308 = vmatpush1.bf16.msra.mxu0 %v576
    %1309 = vmatprep.subr.bf16.mxu0 0
    %1310 = vmatpush1.bf16.msra.mxu0 %v577
    %1311 = vmatprep.subr.bf16.mxu0 0
    %1312 = vmatpush1.bf16.msra.mxu0 %v578
    %1313 = vmatprep.subr.bf16.mxu0 0
    %1314 = vmatpush1.bf16.msra.mxu0 %v579
    %1315 = vmatprep.subr.bf16.mxu0 0
    %1316 = vmatpush1.bf16.msra.mxu0 %v580
    %1317 = vmatprep.subr.bf16.mxu0 0
    %1318 = vmatpush1.bf16.msra.mxu0 %v581
    %1319 = vmatprep.subr.bf16.mxu0 0
    %1320 = vmatpush1.bf16.msra.mxu0 %v582
    %1321 = vmatprep.subr.bf16.mxu0 0
    %1322 = vmatpush1.bf16.msra.mxu0 %v583
    %1323 = vmatprep.mubr.bf16.mxu0 %v1237
    %1324 = vmatmul.mubr.bf16.gmra.mrb[0].mxu0 %v1236
    %v1325 = vpop.f32.mrb[0].mxu0
    %v1326 = vadd.f32 %v1285, %v1325
    %v1327 = vpop.f32.mrb[0].mxu0
    %v1328 = vpop.f32.mrb[0].mxu0
    %v1329 = vadd.f32 %v1288, %v1328
    %v1330 = vpop.f32.mrb[0].mxu0
    %1331 = vdwg.mxu0
    %1332 = vmatprep.subr.bf16.mxu0 0
    %1333 = vmatpush1.bf16.msra.mxu0 %v584
    %1334 = vmatprep.subr.bf16.mxu0 0
    %1335 = vmatpush1.bf16.msra.mxu0 %v585
    %1336 = vmatprep.subr.bf16.mxu0 0
    %1337 = vmatpush1.bf16.msra.mxu0 %v586
    %1338 = vmatprep.subr.bf16.mxu0 0
    %1339 = vmatpush1.bf16.msra.mxu0 %v587
    %1340 = vmatprep.subr.bf16.mxu0 0
    %1341 = vmatpush1.bf16.msra.mxu0 %v588
    %1342 = vmatprep.subr.bf16.mxu0 0
    %1343 = vmatpush1.bf16.msra.mxu0 %v589
    %1344 = vmatprep.subr.bf16.mxu0 0
    %1345 = vmatpush1.bf16.msra.mxu0 %v590
    %1346 = vmatprep.subr.bf16.mxu0 0
    %1347 = vmatpush1.bf16.msra.mxu0 %v591
    %1348 = vmatprep.subr.bf16.mxu0 0
    %1349 = vmatpush1.bf16.msra.mxu0 %v592
    %1350 = vmatprep.subr.bf16.mxu0 0
    %1351 = vmatpush1.bf16.msra.mxu0 %v593
    %1352 = vmatprep.subr.bf16.mxu0 0
    %1353 = vmatpush1.bf16.msra.mxu0 %v594
    %1354 = vmatprep.subr.bf16.mxu0 0
    %1355 = vmatpush1.bf16.msra.mxu0 %v595
    %1356 = vmatprep.subr.bf16.mxu0 0
    %1357 = vmatpush1.bf16.msra.mxu0 %v596
    %1358 = vmatprep.subr.bf16.mxu0 0
    %1359 = vmatpush1.bf16.msra.mxu0 %v597
    %1360 = vmatprep.subr.bf16.mxu0 0
    %1361 = vmatpush1.bf16.msra.mxu0 %v598
    %1362 = vmatprep.subr.bf16.mxu0 0
    %1363 = vmatpush1.bf16.msra.mxu0 %v599
    %1364 = vmatprep.mubr.bf16.mxu0 %v1239
    %1365 = vmatmul.mubr.bf16.gmra.mrb[0].mxu0 %v1238
    %v1366 = vpop.f32.mrb[0].mxu0
    %v1367 = vadd.f32 %v1326, %v1366
    %v1368 = vpop.f32.mrb[0].mxu0
    %v1369 = vpop.f32.mrb[0].mxu0
    %v1370 = vadd.f32 %v1329, %v1369
    %v1371 = vpop.f32.mrb[0].mxu0
    %1372 = vdwg.mxu0
    %1373 = vmatprep.subr.bf16.mxu0 0
    %1374 = vmatpush1.bf16.msra.mxu0 %v600
    %1375 = vmatprep.subr.bf16.mxu0 0
    %1376 = vmatpush1.bf16.msra.mxu0 %v601
    %1377 = vmatprep.subr.bf16.mxu0 0
    %1378 = vmatpush1.bf16.msra.mxu0 %v602
    %1379 = vmatprep.subr.bf16.mxu0 0
    %1380 = vmatpush1.bf16.msra.mxu0 %v603
    %1381 = vmatprep.subr.bf16.mxu0 0
    %1382 = vmatpush1.bf16.msra.mxu0 %v604
    %1383 = vmatprep.subr.bf16.mxu0 0
    %1384 = vmatpush1.bf16.msra.mxu0 %v605
    %1385 = vmatprep.subr.bf16.mxu0 0
    %1386 = vmatpush1.bf16.msra.mxu0 %v606
    %1387 = vmatprep.subr.bf16.mxu0 0
    %1388 = vmatpush1.bf16.msra.mxu0 %v607
    %1389 = vmatprep.subr.bf16.mxu0 0
    %1390 = vmatpush1.bf16.msra.mxu0 %v608
    %1391 = vmatprep.subr.bf16.mxu0 0
    %1392 = vmatpush1.bf16.msra.mxu0 %v609
    %1393 = vmatprep.subr.bf16.mxu0 0
    %1394 = vmatpush1.bf16.msra.mxu0 %v610
    %1395 = vmatprep.subr.bf16.mxu0 0
    %1396 = vmatpush1.bf16.msra.mxu0 %v611
    %1397 = vmatprep.subr.bf16.mxu0 0
    %1398 = vmatpush1.bf16.msra.mxu0 %v612
    %1399 = vmatprep.subr.bf16.mxu0 0
    %1400 = vmatpush1.bf16.msra.mxu0 %v613
    %1401 = vmatprep.subr.bf16.mxu0 0
    %1402 = vmatpush1.bf16.msra.mxu0 %v614
    %1403 = vmatprep.subr.bf16.mxu0 0
    %1404 = vmatpush1.bf16.msra.mxu0 %v615
    %1405 = vmatprep.mubr.bf16.mxu0 %v1241
    %1406 = vmatmul.mubr.bf16.gmra.mrb[0].mxu0 %v1240
    %v1407 = vpop.f32.mrb[0].mxu0
    %v1408 = vadd.f32 %v1367, %v1407
    %v1409 = vpop.f32.mrb[0].mxu0
    %v1410 = vpop.f32.mrb[0].mxu0
    %v1411 = vadd.f32 %v1370, %v1410
    %v1412 = vpop.f32.mrb[0].mxu0
    %1413 = vdwg.mxu0
    %v1414 = vmax.f32 %v1408, 0.0
    %v1415 = vmax.f32 %v1411, 0.0
    %v1416 = vpack.c.bf16 %v1415, %v1414
    %1417 = vmatprep.subr.bf16.mxu0 0
    %1418 = vmatpush1.bf16.msra.mxu0 %v885
    %1419 = vmatprep.subr.bf16.mxu0 0
    %1420 = vmatpush1.bf16.msra.mxu0 %v886
    %1421 = vmatprep.subr.bf16.mxu0 0
    %1422 = vmatpush1.bf16.msra.mxu0 %v887
    %1423 = vmatprep.subr.bf16.mxu0 0
    %1424 = vmatpush1.bf16.msra.mxu0 %v888
    %1425 = vmatprep.subr.bf16.mxu0 0
    %1426 = vmatpush1.bf16.msra.mxu0 %v889
    %1427 = vmatprep.subr.bf16.mxu0 0
    %1428 = vmatpush1.bf16.msra.mxu0 %v890
    %1429 = vmatprep.subr.bf16.mxu0 0
    %1430 = vmatpush1.bf16.msra.mxu0 %v891
    %1431 = vmatprep.subr.bf16.mxu0 0
    %1432 = vmatpush1.bf16.msra.mxu0 %v892
    %1433 = vmatprep.subr.bf16.mxu0 0
    %1434 = vmatpush1.bf16.msra.mxu0 0
    %1435 = vmatprep.subr.bf16.mxu0 0
    %1436 = vmatpush1.bf16.msra.mxu0 0
    %1437 = vmatprep.subr.bf16.mxu0 0
    %1438 = vmatpush1.bf16.msra.mxu0 0
    %1439 = vmatprep.subr.bf16.mxu0 0
    %1440 = vmatpush1.bf16.msra.mxu0 0
    %1441 = vmatprep.subr.bf16.mxu0 0
    %1442 = vmatpush1.bf16.msra.mxu0 0
    %1443 = vmatprep.subr.bf16.mxu0 0
    %1444 = vmatpush1.bf16.msra.mxu0 0
    %1445 = vmatprep.subr.bf16.mxu0 0
    %1446 = vmatpush1.bf16.msra.mxu0 0
    %1447 = vmatprep.subr.bf16.mxu0 0
    %1448 = vmatpush1.bf16.msra.mxu0 0
    %1449 = vmatprep.mubr.bf16.mxu0 0
    %1450 = vmatmul.mubr.bf16.gmra.mrb[0].mxu0 %v1416
    %v1451 = vpop.f32.mrb[0].mxu0
    %v1452 = vadd.f32 %v851, %v1451
    %v1453 = vpop.f32.mrb[0].mxu0
    %v1454 = vpop.f32.mrb[0].mxu0
    %v1455 = vadd.f32 %v851, %v1454
    %v1456 = vpop.f32.mrb[0].mxu0
    %1457 = vdwg.mxu0
    %1458 = vst [vmem:[#allocation11 + $0x10] sm:$0xff] %v1452
    %1459 = vst [vmem:[#allocation11 + $0x28] sm:$0xff] %v1455
    // Predicated region
    $region50: #{tpu_custom_call.1} parent=1 // pred_check
      _
    $region51: #{tpu_custom_call.1} parent=1 // pred_check_branch
      %1461 = sbr.rel (0) target = $region53
    $region52: #{tpu_custom_call.1} parent=1 // pred_region
      %s1463 = ssub.s32 768, 768
      %1464 = vsyncadd [#allocation4], %s1463
      %s1465 = sshll.u32 [#allocation11], 4
      %s1466 = int_to_ptr.vmem [resolvable:$true] %s1465
      %1471 = dma.vmem_to_hbm [thread:$0]  %s1466, 768, %s7, [#allocation4], 384, 384, 24
    $region53: #{tpu_custom_call.1} parent=1 // pred_fallthru
      _
    // Predicated region
    $region54: #{tpu_custom_call.1} parent=1 // pred_check
      _
    $region55: #{tpu_custom_call.1} parent=1 // pred_check_branch
      %1473 = sbr.rel (0) target = $region57
    $region56: #{tpu_custom_call.1} parent=1 // pred_region
      %1474 = dma.done [#allocation4], 768
    $region57: #{tpu_custom_call.1} parent=1 // pred_fallthru
      _
    %1475 = vsyncpa [#allocation3], 1
    %1476 = vsyncpa [#allocation6], 1
    %1477 = vsyncpa [#allocation9], 1
    %1478 = vsyncpa [#allocation4], 1

</llo_original>
